<compile_context>
chip_gen: v7x
topology: tpu7x:2x2x1
jax: 0.10.0
libtpu: 0.0.40
codegen_flags: <defaults>
</compile_context>

<pallas_src>
import functools

import jax
import jax.numpy as jnp
from jax import lax
from jax.experimental import pallas as pl
from jax.experimental.pallas import tpu as pltpu


def _round_up(n, m):
    return ((n + m - 1) // m) * m


# "NT" dimension numbers (contract both operands over their minor dim), the
# same pattern the reference TPU flash-attention kernel uses for q @ k^T.
_NT_DIMS = (((1,), (1,)), ((), ()))


# ----------------------------------------------------------------------------
# Kernel: one batch tile of the full forward pass.
#   shared  : Linear(P,H) -> ReLU -> Linear(H,H) -> ReLU -> Dropout(id)
#   fusion  : Linear(H,H) -> ReLU -> Linear(H,H) -> ReLU -> Dropout(id)
#   predict : Linear(H,3) -> Softmax over classes
#   odds nan -> 0
#   fusion2 : Linear(3+O,3) -> ReLU -> Linear(3,3) -> Softmax over classes
# Tail is computed with classes/odds on sublanes and batch on lanes.
# ----------------------------------------------------------------------------
def _dpn_odds_kernel(x1_ref, x2_ref, odds_t_ref,
                     ws1_ref, whh_ref, b_ref, wp8_ref, head_ref,
                     out_ref):
    f32 = jnp.float32
    bf16 = jnp.bfloat16
    T = x1_ref.shape[0]          # batch tile (rows)
    O = odds_t_ref.shape[0]      # odds_input_size (static at trace time)

    def mm(x, w):
        # Large matmul on the MXU: bf16 operands, f32 accumulation.
        return jnp.dot(x.astype(bf16), w, preferred_element_type=f32)

    def softmax_sub(z):
        # Softmax over axis 0 (classes on sublanes, batch on lanes) -> cheap
        # sublane reductions, lane-dense elementwise math.
        m = jnp.max(z, axis=0, keepdims=True)
        e = jnp.exp(z - m)
        s = jnp.sum(e, axis=0, keepdims=True)
        r = pl.reciprocal(s, approx=True)   # EUP slot (otherwise idle)
        r = r * (2.0 - s * r)               # one Newton step -> ~f32 accuracy
        return e * r

    b = b_ref[...]        # (4, H)    packed biases [bs1; bs2; bf1; bf2], f32
    hs = head_ref[...]    # (8, 9+O)  packed head params, f32

    # ---- shared branch: stack x1/x2 along sublanes, run once as (2T, P) ----
    x12 = jnp.concatenate([x1_ref[...], x2_ref[...]], axis=0)        # (2T, P)
    h = jnp.maximum(mm(x12, ws1_ref[...]) + b[0:1, :], 0.0)
    h = jnp.maximum(mm(h, whh_ref[0]) + b[1:2, :], 0.0)
    # TODO(synk): Dropout(0.1) is identity in eval mode; training-mode
    # stochastic dropout not implemented.

    # ---- fusion(y1 - y2) ----
    d = h[:T, :] - h[T:, :]                                          # (T, H)
    h = jnp.maximum(mm(d, whh_ref[1]) + b[2:3, :], 0.0)
    h = jnp.maximum(mm(h, whh_ref[2]) + b[3:4, :], 0.0)              # (T, H)

    # ---- prediction head, produced directly transposed as (8, T) ----------
    # logits8 = wp8 @ h^T via NT dims (no explicit transpose of h).
    # Rows 3..7 of wp8 are zero and their bias (head col 0) is -1e30, so they
    # softmax to exactly 0 and never contaminate the real 3 classes.
    logits8 = lax.dot_general(wp8_ref[...], h.astype(bf16), _NT_DIMS,
                              preferred_element_type=f32)            # (8, T)
    yd = softmax_sub(logits8 + hs[:, 0:1])                           # (8, T)

    # ---- odds: NaN -> 0 (already transposed to (O, T) = batch on lanes) ----
    odds = odds_t_ref[...].astype(f32)
    odds = jnp.where(jnp.isnan(odds), 0.0, odds)                     # (O, T)

    # ---- fusion2 over concat([yd, odds]) as lane-dense VPU FMAs -----------
    # z[j, t] = bo1[j] + sum_k wo1[k, j] * in[k, t]
    z = hs[:3, 4 + O:5 + O]                                          # bo1 (3,1)
    for k in range(3):                    # yd part of the concat weight
        z = z + hs[:3, 1 + k:2 + k] * yd[k:k + 1, :]
    for k in range(O):                    # odds part of the concat weight
        z = z + hs[:3, 4 + k:5 + k] * odds[k:k + 1, :]
    z = jnp.maximum(z, 0.0)                                          # (3, T)

    z2 = hs[:3, 8 + O:9 + O]                                         # bo2 (3,1)
    for k in range(3):                    # wo2
        z2 = z2 + hs[:3, 5 + O + k:6 + O + k] * z[k:k + 1, :]

    out_ref[...] = softmax_sub(z2)        # (3, T): lane-dense stores


# ----------------------------------------------------------------------------
# Parameters (deterministic, mimics PyTorch nn.Linear default init)
# ----------------------------------------------------------------------------
def _linear_params(key, fan_in, fan_out):
    kw, kb = jax.random.split(key)
    bound = 1.0 / jnp.sqrt(jnp.float32(fan_in))
    # stored as (in, out) so row-major layers do x @ W + b
    w = jax.random.uniform(kw, (fan_in, fan_out), jnp.float32, -bound, bound)
    b = jax.random.uniform(kb, (1, fan_out), jnp.float32, -bound, bound)
    return w, b


def make_params(key, player_input_size, odds_input_size, hidden_size=128):
    keys = jax.random.split(key, 7)
    ws1, bs1 = _linear_params(keys[0], player_input_size, hidden_size)
    ws2, bs2 = _linear_params(keys[1], hidden_size, hidden_size)
    wf1, bf1 = _linear_params(keys[2], hidden_size, hidden_size)
    wf2, bf2 = _linear_params(keys[3], hidden_size, hidden_size)
    wp, bp = _linear_params(keys[4], hidden_size, 3)
    wo1, bo1 = _linear_params(keys[5], 3 + odds_input_size, 3)
    wo2, bo2 = _linear_params(keys[6], 3, 3)
    return dict(ws1=ws1, bs1=bs1, ws2=ws2, bs2=bs2, wf1=wf1, bf1=bf1,
                wf2=wf2, bf2=bf2, wp=wp, bp=bp, wo1=wo1, bo1=bo1,
                wo2=wo2, bo2=bo2)


def pack_params(p):
    """Pack per-layer params into 5 kernel operands (fewer DMAs).

    MXU weight operands stored in bf16; biases / tiny head params stay f32.
    The head params are pre-transposed for the batch-on-lanes tail layout.
    """
    bf16 = jnp.bfloat16
    H = p["wp"].shape[0]
    O = p["wo1"].shape[0] - 3
    NEG = -1e30  # pad bias -> padded rows softmax to 0

    ws1 = p["ws1"].astype(bf16)                                        # (P, H)
    w_hh = jnp.stack([p["ws2"], p["wf1"], p["wf2"]]).astype(bf16)      # (3,H,H)
    b_pack = jnp.concatenate(
        [p["bs1"], p["bs2"], p["bf1"], p["bf2"]], axis=0)              # (4, H)
    # prediction weight: wp^T zero-padded to 8 rows (one full sublane tile)
    wp8 = jnp.zeros((8, H), jnp.float32).at[:3, :].set(p["wp"].T).astype(bf16)
    # packed f32 head params, all transposed (classes on rows):
    #   col 0            : bp padded to 8 rows with -1e30
    #   cols 1 .. 3      : wo1^T yd part      (3, 3)
    #   cols 4 .. 3+O    : wo1^T odds part    (3, O)
    #   col 4+O          : bo1                (3, 1)
    #   cols 5+O .. 7+O  : wo2^T              (3, 3)
    #   col 8+O          : bo2                (3, 1)
    bp8 = jnp.full((8,), NEG, jnp.float32).at[:3].set(p["bp"][0])
    head3 = jnp.concatenate(
        [p["wo1"].T, p["bo1"].T, p["wo2"].T, p["bo2"].T], axis=1)      # (3,8+O)
    head = jnp.zeros((8, 9 + O), jnp.float32)
    head = head.at[:, 0].set(bp8)
    head = head.at[:3, 1:].set(head3)
    return dict(ws1=ws1, w_hh=w_hh, b_pack=b_pack, wp8=wp8, head=head)


# ----------------------------------------------------------------------------
# Wrapper: batch-tiled pallas_call; weights resident, inputs/outputs blocked.
# ----------------------------------------------------------------------------
@functools.partial(jax.jit, static_argnames=("tile_b",))
def dense_prediction_net_with_odds(x1, x2, odds, kparams, tile_b=2048):
    B, P = x1.shape
    O = odds.shape[1]
    H = kparams["b_pack"].shape[1]

    if B > 128:
        # Lane-aligned batch tile, NO input padding: cdiv grid + Pallas
        # boundary blocks (rows are independent; junk columns discarded).
        tile = max(128, (min(int(tile_b), B) // 128) * 128)
        # Keep >= 2 grid steps so the "parallel" axis can be split across
        # both v7x TensorCores (no effect on v5e/v6e).
        if pl.cdiv(B, tile) < 2:
            tile = ((B + 1) // 2 + 127) // 128 * 128
        Bp = B
    else:
        # Tiny-batch path: one full-array block, pad a handful of rows so the
        # sublane stack/split inside the kernel stays 8-aligned.
        tile = _round_up(max(B, 1), 8)
        Bp = tile
        if Bp != B:
            pad = ((0, Bp - B), (0, 0))
            x1 = jnp.pad(x1, pad)
            x2 = jnp.pad(x2, pad)
            odds = jnp.pad(odds, pad)
    grid = (pl.cdiv(Bp, tile),)

    odds_t = odds.T                      # (O, Bp): batch on lanes (tiny copy)

    def row_block(width):                # (batch, features) operands
        return pl.BlockSpec((tile, width), lambda i: (i, 0))

    def col_block(height):               # (features, batch) operands
        return pl.BlockSpec((height, tile), lambda i: (0, i))

    def resident(shape):                 # weights: constant index_map
        return pl.BlockSpec(tuple(shape), lambda i: (0,) * len(shape))

    # Advisory cost hint for XLA's scheduler around the custom call.
    flops = int(4 * Bp * P * H + 8 * Bp * H * H + 16 * Bp * H
                + 6 * Bp * (6 + O))
    transc = int(13 * Bp)
    bytes_acc = int(4 * (2 * Bp * P + Bp * O + 3 * Bp)
                    + 2 * (P * H + 3 * H * H + 8 * H)
                    + 4 * (4 * H + 8 * (9 + O)))

    out_t = pl.pallas_call(
        _dpn_odds_kernel,
        out_shape=jax.ShapeDtypeStruct((3, Bp), jnp.float32),
        grid=grid,
        in_specs=[
            row_block(P),                         # x1      (B, P)  f32
            row_block(P),                         # x2      (B, P)  f32
            col_block(O),                         # odds^T  (O, B)  f32
            resident(kparams["ws1"].shape),       # (P, H)          bf16
            resident(kparams["w_hh"].shape),      # (3, H, H)       bf16
            resident(kparams["b_pack"].shape),    # (4, H)          f32
            resident(kparams["wp8"].shape),       # (8, H)          bf16
            resident(kparams["head"].shape),      # (8, 9+O)        f32
        ],
        out_specs=col_block(3),                   # (3, B) lane-dense output
        compiler_params=pltpu.CompilerParams(
            dimension_semantics=("parallel",),
            vmem_limit_bytes=64 * 1024 * 1024),
        cost_estimate=pl.CostEstimate(
            flops=flops, transcendentals=transc, bytes_accessed=bytes_acc),
    )(x1, x2, odds_t, kparams["ws1"], kparams["w_hh"], kparams["b_pack"],
      kparams["wp8"], kparams["head"])

    return out_t[:, :B].T                 # back to PyTorch's (B, 3)


# ----------------------------------------------------------------------------
# Pure-JAX f32 reference for sanity checking.
# ----------------------------------------------------------------------------
def reference(x1, x2, odds, p):
    def lin(x, w, b):
        return x @ w + b

    def shared(x):
        h = jax.nn.relu(lin(x, p["ws1"], p["bs1"]))
        return jax.nn.relu(lin(h, p["ws2"], p["bs2"]))

    y1, y2 = shared(x1), shared(x2)
    h = jax.nn.relu(lin(y1 - y2, p["wf1"], p["bf1"]))
    h = jax.nn.relu(lin(h, p["wf2"], p["bf2"]))
    yd = jax.nn.softmax(lin(h, p["wp"], p["bp"]), axis=1)
    o = jnp.where(jnp.isnan(odds), 0.0, odds)
    z = jax.nn.relu(jnp.concatenate([yd, o], axis=1) @ p["wo1"] + p["bo1"])
    return jax.nn.softmax(z @ p["wo2"] + p["bo2"], axis=1)


if __name__ == "__main__":
    B = 8            # batch
    PLAYER_IN = 32   # player_input_size
    ODDS_IN = 4      # odds_input_size
    HIDDEN = 128     # hidden_size (module default)

    key = jax.random.PRNGKey(0)
    k_x1, k_x2, k_odds, k_params = jax.random.split(key, 4)

    x1 = jax.random.normal(k_x1, (B, PLAYER_IN), jnp.float32)
    x2 = jax.random.normal(k_x2, (B, PLAYER_IN), jnp.float32)
    odds = jax.random.normal(k_odds, (B, ODDS_IN), jnp.float32)
    # inject NaNs so the odds[isnan(odds)] = 0 path is exercised
    odds = odds.at[0, 1].set(jnp.nan).at[3, 0].set(jnp.nan)

    params = make_params(k_params, PLAYER_IN, ODDS_IN, HIDDEN)
    kparams = pack_params(params)

    out = dense_prediction_net_with_odds(x1, x2, odds, kparams)
    out = jax.block_until_ready(out)

    ref = reference(x1, x2, odds, params)
    assert out.shape == (B, 3)
    # Softmax rows still sum to ~1 (Newton-refined approx reciprocal, f32 out).
    assert jnp.allclose(jnp.sum(out, axis=1), 1.0, atol=1e-4)
    # bf16 MXU operands -> looser tolerance vs. the pure-f32 reference.
    assert jnp.allclose(out, ref, atol=5e-2), float(jnp.max(jnp.abs(out - ref)))

    print("KERNEL_OK")
</pallas_src>

<mosaic_0001>
module attributes {stable_mosaic.version = 11 : i64} {
  func.func @_dpn_odds_kernel(%arg0: i32, %arg1: memref<8x32xf32, #tpu.memory_space<vmem>>, %arg2: memref<8x32xf32, #tpu.memory_space<vmem>>, %arg3: memref<4x8xf32, #tpu.memory_space<vmem>>, %arg4: memref<32x128xbf16, #tpu.memory_space<vmem>>, %arg5: memref<3x128x128xbf16, #tpu.memory_space<vmem>>, %arg6: memref<4x128xf32, #tpu.memory_space<vmem>>, %arg7: memref<8x128xbf16, #tpu.memory_space<vmem>>, %arg8: memref<8x13xf32, #tpu.memory_space<vmem>>, %arg9: memref<3x8xf32, #tpu.memory_space<vmem>>) attributes {dimension_semantics = [#tpu.dimension_semantics<parallel>], iteration_bounds = array<i64: 1>, scalar_prefetch = 0 : i64, scratch_operands = 0 : i64, tpu.core_type = #tpu.core_type<tc>, window_params = [{transform_indices = @transform_0, window_bounds = array<i64: 8, 32>}, {transform_indices = @transform_1, window_bounds = array<i64: 8, 32>}, {transform_indices = @transform_2, window_bounds = array<i64: 4, 8>}, {pipeline_mode = #tpu.pipeline_mode<synchronous>, transform_indices = @transform_3, window_bounds = array<i64: 32, 128>}, {pipeline_mode = #tpu.pipeline_mode<synchronous>, transform_indices = @transform_4, window_bounds = array<i64: 3, 128, 128>}, {pipeline_mode = #tpu.pipeline_mode<synchronous>, transform_indices = @transform_5, window_bounds = array<i64: 4, 128>}, {pipeline_mode = #tpu.pipeline_mode<synchronous>, transform_indices = @transform_6, window_bounds = array<i64: 8, 128>}, {pipeline_mode = #tpu.pipeline_mode<synchronous>, transform_indices = @transform_7, window_bounds = array<i64: 8, 13>}, {transform_indices = @transform_8, window_bounds = array<i64: 3, 8>}]} {
    %c0 = arith.constant 0 : index
    %c0_0 = arith.constant 0 : index
    %0 = vector.load %arg6[%c0, %c0_0] : memref<4x128xf32, #tpu.memory_space<vmem>>, vector<4x128xf32>
    %c0_1 = arith.constant 0 : index
    %c0_2 = arith.constant 0 : index
    %1 = vector.load %arg8[%c0_1, %c0_2] : memref<8x13xf32, #tpu.memory_space<vmem>>, vector<8x13xf32>
    %c0_3 = arith.constant 0 : index
    %c0_4 = arith.constant 0 : index
    %2 = vector.load %arg1[%c0_3, %c0_4] : memref<8x32xf32, #tpu.memory_space<vmem>>, vector<8x32xf32>
    %c0_5 = arith.constant 0 : index
    %c0_6 = arith.constant 0 : index
    %3 = vector.load %arg2[%c0_5, %c0_6] : memref<8x32xf32, #tpu.memory_space<vmem>>, vector<8x32xf32>
    %4 = tpu.concatenate %2, %3 in 0 : vector<8x32xf32>, vector<8x32xf32> -> vector<16x32xf32>
    %c0_7 = arith.constant 0 : index
    %c0_8 = arith.constant 0 : index
    %5 = vector.load %arg4[%c0_7, %c0_8] : memref<32x128xbf16, #tpu.memory_space<vmem>>, vector<32x128xbf16>
    %6 = arith.truncf %4 : vector<16x32xf32> to vector<16x32xbf16>
    %cst = arith.constant dense<0.000000e+00> : vector<16x128xf32>
    %7 = tpu.matmul %6, %5, %cst {dimension_numbers = #tpu.dot_dimension_numbers<[1], [0], [0], [1], [0, 0, 1, 1], [], []>} : vector<16x32xbf16>, vector<32x128xbf16>, vector<16x128xf32> -> vector<16x128xf32>
    %8 = vector.extract_strided_slice %0 {offsets = [0, 0], sizes = [1, 128], strides = [1, 1]} : vector<4x128xf32> to vector<1x128xf32>
    %9 = vector.broadcast %8 : vector<1x128xf32> to vector<16x128xf32>
    %10 = arith.addf %7, %9 : vector<16x128xf32>
    %cst_9 = arith.constant 0.000000e+00 : f32
    %11 = vector.broadcast %cst_9 : f32 to vector<16x128xf32>
    %12 = arith.maximumf %10, %11 : vector<16x128xf32>
    %c0_10 = arith.constant 0 : index
    %c0_11 = arith.constant 0 : index
    %c0_12 = arith.constant 0 : index
    %13 = vector.load %arg5[%c0_10, %c0_11, %c0_12] : memref<3x128x128xbf16, #tpu.memory_space<vmem>>, vector<1x128x128xbf16>
    %14 = vector.shape_cast %13 : vector<1x128x128xbf16> to vector<128x128xbf16>
    %15 = arith.truncf %12 : vector<16x128xf32> to vector<16x128xbf16>
    %cst_13 = arith.constant dense<0.000000e+00> : vector<16x128xf32>
    %16 = tpu.matmul %15, %14, %cst_13 {dimension_numbers = #tpu.dot_dimension_numbers<[1], [0], [0], [1], [0, 0, 1, 1], [], []>} : vector<16x128xbf16>, vector<128x128xbf16>, vector<16x128xf32> -> vector<16x128xf32>
    %17 = vector.extract_strided_slice %0 {offsets = [1, 0], sizes = [1, 128], strides = [1, 1]} : vector<4x128xf32> to vector<1x128xf32>
    %18 = vector.broadcast %17 : vector<1x128xf32> to vector<16x128xf32>
    %19 = arith.addf %16, %18 : vector<16x128xf32>
    %cst_14 = arith.constant 0.000000e+00 : f32
    %20 = vector.broadcast %cst_14 : f32 to vector<16x128xf32>
    %21 = arith.maximumf %19, %20 : vector<16x128xf32>
    %22 = vector.extract_strided_slice %21 {offsets = [0, 0], sizes = [8, 128], strides = [1, 1]} : vector<16x128xf32> to vector<8x128xf32>
    %23 = vector.extract_strided_slice %21 {offsets = [8, 0], sizes = [8, 128], strides = [1, 1]} : vector<16x128xf32> to vector<8x128xf32>
    %24 = arith.subf %22, %23 : vector<8x128xf32>
    %c1 = arith.constant 1 : index
    %c0_15 = arith.constant 0 : index
    %c0_16 = arith.constant 0 : index
    %25 = vector.load %arg5[%c1, %c0_15, %c0_16] : memref<3x128x128xbf16, #tpu.memory_space<vmem>>, vector<1x128x128xbf16>
    %26 = vector.shape_cast %25 : vector<1x128x128xbf16> to vector<128x128xbf16>
    %27 = arith.truncf %24 : vector<8x128xf32> to vector<8x128xbf16>
    %cst_17 = arith.constant dense<0.000000e+00> : vector<8x128xf32>
    %28 = tpu.matmul %27, %26, %cst_17 {dimension_numbers = #tpu.dot_dimension_numbers<[1], [0], [0], [1], [0, 0, 1, 1], [], []>} : vector<8x128xbf16>, vector<128x128xbf16>, vector<8x128xf32> -> vector<8x128xf32>
    %29 = vector.extract_strided_slice %0 {offsets = [2, 0], sizes = [1, 128], strides = [1, 1]} : vector<4x128xf32> to vector<1x128xf32>
    %30 = vector.broadcast %29 : vector<1x128xf32> to vector<8x128xf32>
    %31 = arith.addf %28, %30 : vector<8x128xf32>
    %cst_18 = arith.constant 0.000000e+00 : f32
    %32 = vector.broadcast %cst_18 : f32 to vector<8x128xf32>
    %33 = arith.maximumf %31, %32 : vector<8x128xf32>
    %c2 = arith.constant 2 : index
    %c0_19 = arith.constant 0 : index
    %c0_20 = arith.constant 0 : index
    %34 = vector.load %arg5[%c2, %c0_19, %c0_20] : memref<3x128x128xbf16, #tpu.memory_space<vmem>>, vector<1x128x128xbf16>
    %35 = vector.shape_cast %34 : vector<1x128x128xbf16> to vector<128x128xbf16>
    %36 = arith.truncf %33 : vector<8x128xf32> to vector<8x128xbf16>
    %cst_21 = arith.constant dense<0.000000e+00> : vector<8x128xf32>
    %37 = tpu.matmul %36, %35, %cst_21 {dimension_numbers = #tpu.dot_dimension_numbers<[1], [0], [0], [1], [0, 0, 1, 1], [], []>} : vector<8x128xbf16>, vector<128x128xbf16>, vector<8x128xf32> -> vector<8x128xf32>
    %38 = vector.extract_strided_slice %0 {offsets = [3, 0], sizes = [1, 128], strides = [1, 1]} : vector<4x128xf32> to vector<1x128xf32>
    %39 = vector.broadcast %38 : vector<1x128xf32> to vector<8x128xf32>
    %40 = arith.addf %37, %39 : vector<8x128xf32>
    %cst_22 = arith.constant 0.000000e+00 : f32
    %41 = vector.broadcast %cst_22 : f32 to vector<8x128xf32>
    %42 = arith.maximumf %40, %41 : vector<8x128xf32>
    %c0_23 = arith.constant 0 : index
    %c0_24 = arith.constant 0 : index
    %43 = vector.load %arg7[%c0_23, %c0_24] : memref<8x128xbf16, #tpu.memory_space<vmem>>, vector<8x128xbf16>
    %44 = arith.truncf %42 : vector<8x128xf32> to vector<8x128xbf16>
    %cst_25 = arith.constant dense<0.000000e+00> : vector<8x8xf32>
    %45 = tpu.matmul %43, %44, %cst_25 {dimension_numbers = #tpu.dot_dimension_numbers<[1], [1], [0], [0], [0, 0, 1, 0], [], []>} : vector<8x128xbf16>, vector<8x128xbf16>, vector<8x8xf32> -> vector<8x8xf32>
    %46 = vector.extract_strided_slice %1 {offsets = [0, 0], sizes = [8, 1], strides = [1, 1]} : vector<8x13xf32> to vector<8x1xf32>
    %47 = vector.broadcast %46 : vector<8x1xf32> to vector<8x8xf32>
    %48 = arith.addf %45, %47 : vector<8x8xf32>
    %cst_26 = arith.constant dense<0xFF800000> : vector<8xf32>
    %49 = vector.multi_reduction <maximumf>, %48, %cst_26 [0] : vector<8x8xf32> to vector<8xf32>
    %50 = vector.shape_cast %49 : vector<8xf32> to vector<1x8xf32>
    %51 = vector.broadcast %50 : vector<1x8xf32> to vector<8x8xf32>
    %52 = arith.subf %48, %51 : vector<8x8xf32>
    %53 = math.exp %52 : vector<8x8xf32>
    %cst_27 = arith.constant dense<0.000000e+00> : vector<8xf32>
    %54 = vector.multi_reduction <add>, %53, %cst_27 [0] : vector<8x8xf32> to vector<8xf32>
    %55 = vector.shape_cast %54 : vector<8xf32> to vector<1x8xf32>
    %56 = tpu.reciprocal %55 {approx = true} : vector<1x8xf32> -> vector<1x8xf32>
    %57 = arith.mulf %55, %56 : vector<1x8xf32>
    %cst_28 = arith.constant 2.000000e+00 : f32
    %58 = vector.broadcast %cst_28 : f32 to vector<1x8xf32>
    %59 = arith.subf %58, %57 : vector<1x8xf32>
    %60 = arith.mulf %56, %59 : vector<1x8xf32>
    %61 = vector.broadcast %60 : vector<1x8xf32> to vector<8x8xf32>
    %62 = arith.mulf %53, %61 : vector<8x8xf32>
    %c0_29 = arith.constant 0 : index
    %c0_30 = arith.constant 0 : index
    %63 = vector.load %arg3[%c0_29, %c0_30] : memref<4x8xf32, #tpu.memory_space<vmem>>, vector<4x8xf32>
    %64 = arith.cmpf one, %63, %63 : vector<4x8xf32>
    %cst_31 = arith.constant 0.000000e+00 : f32
    %65 = vector.broadcast %cst_31 : f32 to vector<4x8xf32>
    %66 = arith.select %64, %65, %63 : vector<4x8xi1>, vector<4x8xf32>
    %67 = vector.extract_strided_slice %1 {offsets = [0, 8], sizes = [3, 1], strides = [1, 1]} : vector<8x13xf32> to vector<3x1xf32>
    %68 = vector.extract_strided_slice %1 {offsets = [0, 1], sizes = [3, 1], strides = [1, 1]} : vector<8x13xf32> to vector<3x1xf32>
    %69 = vector.extract_strided_slice %62 {offsets = [0, 0], sizes = [1, 8], strides = [1, 1]} : vector<8x8xf32> to vector<1x8xf32>
    %70 = vector.broadcast %68 : vector<3x1xf32> to vector<3x8xf32>
    %71 = vector.broadcast %69 : vector<1x8xf32> to vector<3x8xf32>
    %72 = arith.mulf %70, %71 : vector<3x8xf32>
    %73 = vector.broadcast %67 : vector<3x1xf32> to vector<3x8xf32>
    %74 = arith.addf %73, %72 : vector<3x8xf32>
    %75 = vector.extract_strided_slice %1 {offsets = [0, 2], sizes = [3, 1], strides = [1, 1]} : vector<8x13xf32> to vector<3x1xf32>
    %76 = vector.extract_strided_slice %62 {offsets = [1, 0], sizes = [1, 8], strides = [1, 1]} : vector<8x8xf32> to vector<1x8xf32>
    %77 = vector.broadcast %75 : vector<3x1xf32> to vector<3x8xf32>
    %78 = vector.broadcast %76 : vector<1x8xf32> to vector<3x8xf32>
    %79 = arith.mulf %77, %78 : vector<3x8xf32>
    %80 = arith.addf %74, %79 : vector<3x8xf32>
    %81 = vector.extract_strided_slice %1 {offsets = [0, 3], sizes = [3, 1], strides = [1, 1]} : vector<8x13xf32> to vector<3x1xf32>
    %82 = vector.extract_strided_slice %62 {offsets = [2, 0], sizes = [1, 8], strides = [1, 1]} : vector<8x8xf32> to vector<1x8xf32>
    %83 = vector.broadcast %81 : vector<3x1xf32> to vector<3x8xf32>
    %84 = vector.broadcast %82 : vector<1x8xf32> to vector<3x8xf32>
    %85 = arith.mulf %83, %84 : vector<3x8xf32>
    %86 = arith.addf %80, %85 : vector<3x8xf32>
    %87 = vector.extract_strided_slice %1 {offsets = [0, 4], sizes = [3, 1], strides = [1, 1]} : vector<8x13xf32> to vector<3x1xf32>
    %88 = vector.extract_strided_slice %66 {offsets = [0, 0], sizes = [1, 8], strides = [1, 1]} : vector<4x8xf32> to vector<1x8xf32>
    %89 = vector.broadcast %87 : vector<3x1xf32> to vector<3x8xf32>
    %90 = vector.broadcast %88 : vector<1x8xf32> to vector<3x8xf32>
    %91 = arith.mulf %89, %90 : vector<3x8xf32>
    %92 = arith.addf %86, %91 : vector<3x8xf32>
    %93 = vector.extract_strided_slice %1 {offsets = [0, 5], sizes = [3, 1], strides = [1, 1]} : vector<8x13xf32> to vector<3x1xf32>
    %94 = vector.extract_strided_slice %66 {offsets = [1, 0], sizes = [1, 8], strides = [1, 1]} : vector<4x8xf32> to vector<1x8xf32>
    %95 = vector.broadcast %93 : vector<3x1xf32> to vector<3x8xf32>
    %96 = vector.broadcast %94 : vector<1x8xf32> to vector<3x8xf32>
    %97 = arith.mulf %95, %96 : vector<3x8xf32>
    %98 = arith.addf %92, %97 : vector<3x8xf32>
    %99 = vector.extract_strided_slice %1 {offsets = [0, 6], sizes = [3, 1], strides = [1, 1]} : vector<8x13xf32> to vector<3x1xf32>
    %100 = vector.extract_strided_slice %66 {offsets = [2, 0], sizes = [1, 8], strides = [1, 1]} : vector<4x8xf32> to vector<1x8xf32>
    %101 = vector.broadcast %99 : vector<3x1xf32> to vector<3x8xf32>
    %102 = vector.broadcast %100 : vector<1x8xf32> to vector<3x8xf32>
    %103 = arith.mulf %101, %102 : vector<3x8xf32>
    %104 = arith.addf %98, %103 : vector<3x8xf32>
    %105 = vector.extract_strided_slice %1 {offsets = [0, 7], sizes = [3, 1], strides = [1, 1]} : vector<8x13xf32> to vector<3x1xf32>
    %106 = vector.extract_strided_slice %66 {offsets = [3, 0], sizes = [1, 8], strides = [1, 1]} : vector<4x8xf32> to vector<1x8xf32>
    %107 = vector.broadcast %105 : vector<3x1xf32> to vector<3x8xf32>
    %108 = vector.broadcast %106 : vector<1x8xf32> to vector<3x8xf32>
    %109 = arith.mulf %107, %108 : vector<3x8xf32>
    %110 = arith.addf %104, %109 : vector<3x8xf32>
    %cst_32 = arith.constant 0.000000e+00 : f32
    %111 = vector.broadcast %cst_32 : f32 to vector<3x8xf32>
    %112 = arith.maximumf %110, %111 : vector<3x8xf32>
    %113 = vector.extract_strided_slice %1 {offsets = [0, 12], sizes = [3, 1], strides = [1, 1]} : vector<8x13xf32> to vector<3x1xf32>
    %114 = vector.extract_strided_slice %1 {offsets = [0, 9], sizes = [3, 1], strides = [1, 1]} : vector<8x13xf32> to vector<3x1xf32>
    %115 = vector.extract_strided_slice %112 {offsets = [0, 0], sizes = [1, 8], strides = [1, 1]} : vector<3x8xf32> to vector<1x8xf32>
    %116 = vector.broadcast %114 : vector<3x1xf32> to vector<3x8xf32>
    %117 = vector.broadcast %115 : vector<1x8xf32> to vector<3x8xf32>
    %118 = arith.mulf %116, %117 : vector<3x8xf32>
    %119 = vector.broadcast %113 : vector<3x1xf32> to vector<3x8xf32>
    %120 = arith.addf %119, %118 : vector<3x8xf32>
    %121 = vector.extract_strided_slice %1 {offsets = [0, 10], sizes = [3, 1], strides = [1, 1]} : vector<8x13xf32> to vector<3x1xf32>
    %122 = vector.extract_strided_slice %112 {offsets = [1, 0], sizes = [1, 8], strides = [1, 1]} : vector<3x8xf32> to vector<1x8xf32>
    %123 = vector.broadcast %121 : vector<3x1xf32> to vector<3x8xf32>
    %124 = vector.broadcast %122 : vector<1x8xf32> to vector<3x8xf32>
    %125 = arith.mulf %123, %124 : vector<3x8xf32>
    %126 = arith.addf %120, %125 : vector<3x8xf32>
    %127 = vector.extract_strided_slice %1 {offsets = [0, 11], sizes = [3, 1], strides = [1, 1]} : vector<8x13xf32> to vector<3x1xf32>
    %128 = vector.extract_strided_slice %112 {offsets = [2, 0], sizes = [1, 8], strides = [1, 1]} : vector<3x8xf32> to vector<1x8xf32>
    %129 = vector.broadcast %127 : vector<3x1xf32> to vector<3x8xf32>
    %130 = vector.broadcast %128 : vector<1x8xf32> to vector<3x8xf32>
    %131 = arith.mulf %129, %130 : vector<3x8xf32>
    %132 = arith.addf %126, %131 : vector<3x8xf32>
    %cst_33 = arith.constant dense<0xFF800000> : vector<8xf32>
    %133 = vector.multi_reduction <maximumf>, %132, %cst_33 [0] : vector<3x8xf32> to vector<8xf32>
    %134 = vector.shape_cast %133 : vector<8xf32> to vector<1x8xf32>
    %135 = vector.broadcast %134 : vector<1x8xf32> to vector<3x8xf32>
    %136 = arith.subf %132, %135 : vector<3x8xf32>
    %137 = math.exp %136 : vector<3x8xf32>
    %cst_34 = arith.constant dense<0.000000e+00> : vector<8xf32>
    %138 = vector.multi_reduction <add>, %137, %cst_34 [0] : vector<3x8xf32> to vector<8xf32>
    %139 = vector.shape_cast %138 : vector<8xf32> to vector<1x8xf32>
    %140 = tpu.reciprocal %139 {approx = true} : vector<1x8xf32> -> vector<1x8xf32>
    %141 = arith.mulf %139, %140 : vector<1x8xf32>
    %cst_35 = arith.constant 2.000000e+00 : f32
    %142 = vector.broadcast %cst_35 : f32 to vector<1x8xf32>
    %143 = arith.subf %142, %141 : vector<1x8xf32>
    %144 = arith.mulf %140, %143 : vector<1x8xf32>
    %145 = vector.broadcast %144 : vector<1x8xf32> to vector<3x8xf32>
    %146 = arith.mulf %137, %145 : vector<3x8xf32>
    %c0_36 = arith.constant 0 : index
    %c0_37 = arith.constant 0 : index
    %147 = vector.load %arg9[%c0_36, %c0_37] : memref<3x8xf32, #tpu.memory_space<vmem>>, vector<3x8xf32>
    tpu.vector_store %arg9[%c0_36, %c0_37], %146 {strides = array<i32>} : memref<3x8xf32, #tpu.memory_space<vmem>>, vector<3x8xf32>,
    return
  }
  func.func @transform_0(%arg0: i32) -> (i32, i32) {
    %c0_i32 = arith.constant 0 : i32
    %c0_i32_0 = arith.constant 0 : i32
    return %arg0, %c0_i32 : i32, i32
  }
  func.func @transform_1(%arg0: i32) -> (i32, i32) {
    %c0_i32 = arith.constant 0 : i32
    %c0_i32_0 = arith.constant 0 : i32
    return %arg0, %c0_i32 : i32, i32
  }
  func.func @transform_2(%arg0: i32) -> (i32, i32) {
    %c0_i32 = arith.constant 0 : i32
    %c0_i32_0 = arith.constant 0 : i32
    return %c0_i32, %arg0 : i32, i32
  }
  func.func @transform_3(%arg0: i32) -> (i32, i32) {
    %c0_i32 = arith.constant 0 : i32
    %c0_i32_0 = arith.constant 0 : i32
    %c0_i32_1 = arith.constant 0 : i32
    return %c0_i32, %c0_i32_0 : i32, i32
  }
  func.func @transform_4(%arg0: i32) -> (i32, i32, i32) {
    %c0_i32 = arith.constant 0 : i32
    %c0_i32_0 = arith.constant 0 : i32
    %c0_i32_1 = arith.constant 0 : i32
    %c0_i32_2 = arith.constant 0 : i32
    return %c0_i32, %c0_i32_0, %c0_i32_1 : i32, i32, i32
  }
  func.func @transform_5(%arg0: i32) -> (i32, i32) {
    %c0_i32 = arith.constant 0 : i32
    %c0_i32_0 = arith.constant 0 : i32
    %c0_i32_1 = arith.constant 0 : i32
    return %c0_i32, %c0_i32_0 : i32, i32
  }
  func.func @transform_6(%arg0: i32) -> (i32, i32) {
    %c0_i32 = arith.constant 0 : i32
    %c0_i32_0 = arith.constant 0 : i32
    %c0_i32_1 = arith.constant 0 : i32
    return %c0_i32, %c0_i32_0 : i32, i32
  }
  func.func @transform_7(%arg0: i32) -> (i32, i32) {
    %c0_i32 = arith.constant 0 : i32
    %c0_i32_0 = arith.constant 0 : i32
    %c0_i32_1 = arith.constant 0 : i32
    return %c0_i32, %c0_i32_0 : i32, i32
  }
  func.func @transform_8(%arg0: i32) -> (i32, i32) {
    %c0_i32 = arith.constant 0 : i32
    %c0_i32_0 = arith.constant 0 : i32
    return %c0_i32, %arg0 : i32, i32
  }
}

</mosaic_0001>

<llo_original>
// kernel: dense_prediction_net_with_odds.1
$region0: #{dense_prediction_net_with_odds.1}
  #allocation0 [shape = 'u32[]', space=smem, size = 0x4, offset = 0x4, fixed_abs, tag = 'smem constant byte address 0x4 - core index']
  #allocation1 [shape = 'u32[144,128]{1,0:T(1,128)}', space=vmem, size = 0x12000, scoped, tag = 'internal scratch']
  %s0 = inlined_call_operand.hbm [shape: f32[8,32], index: 0, kind: input, shape index: {}]
  %s1 = inlined_call_operand.hbm [shape: f32[8,32], index: 1, kind: input, shape index: {}]
  %s2 = inlined_call_operand.hbm [shape: f32[4,8], index: 2, kind: input, shape index: {}]
  %s3 = inlined_call_operand.hbm [shape: bf16[32,128], index: 3, kind: input, shape index: {}]
  %s4 = inlined_call_operand.hbm [shape: bf16[3,128,128], index: 4, kind: input, shape index: {}]
  %s5 = inlined_call_operand.hbm [shape: f32[4,128], index: 5, kind: input, shape index: {}]
  %s6 = inlined_call_operand.hbm [shape: bf16[8,128], index: 6, kind: input, shape index: {}]
  %s7 = inlined_call_operand.hbm [shape: f32[8,13], index: 7, kind: input, shape index: {}]
  %s8 = inlined_call_operand.hbm [shape: f32[3,8], index: 8, kind: output, shape index: {}]
  %s9 = sld [smem:[#allocation0]]
  $region74: #{dense_prediction_net_with_odds.1} parent=0
    _
  %s11 = ssub.s32 1, %s9
  %s12 = scalar_select 0, %s11, %s9
  $region1: #{dense_prediction_net_with_odds.1} parent=0
    #allocation2 [shape = 'u8[4096]{0}', space=vmem, size = 0x1000, scoped, tag = 'input window, operand 0, single buffered']
    #allocation3 [shape = 's32[1]{0}', space=sflag, size = 0x4, scoped, tag = 'scoped memory for dense_prediction_net_with_odds.1']
    #allocation4 [shape = 's32[1]{0}', space=sflag, size = 0x4, scoped, tag = 'scoped memory for dense_prediction_net_with_odds.1']
    #allocation5 [shape = 'u8[4096]{0}', space=vmem, size = 0x1000, scoped, tag = 'input window, operand 1, single buffered']
    #allocation6 [shape = 's32[1]{0}', space=sflag, size = 0x4, scoped, tag = 'scoped memory for dense_prediction_net_with_odds.1']
    #allocation7 [shape = 'u8[2048]{0}', space=vmem, size = 0x800, scoped, tag = 'input window, operand 2, single buffered']
    #allocation8 [shape = 'u8[8192]{0}', space=vmem, size = 0x2000, scoped, tag = 'input window, operand 3, single buffered']
    #allocation9 [shape = 's32[1]{0}', space=sflag, size = 0x4, scoped, tag = 'scoped memory for dense_prediction_net_with_odds.1']
    #allocation10 [shape = 'u8[98304]{0}', space=vmem, size = 0x18000, scoped, tag = 'input window, operand 4, single buffered']
    #allocation11 [shape = 'u8[2048]{0}', space=vmem, size = 0x800, scoped, tag = 'input window, operand 5, single buffered']
    #allocation12 [shape = 's32[1]{0}', space=sflag, size = 0x4, scoped, tag = 'scoped memory for dense_prediction_net_with_odds.1']
    #allocation13 [shape = 'u8[2048]{0}', space=vmem, size = 0x800, scoped, tag = 'input window, operand 6, single buffered']
    #allocation14 [shape = 'u8[4096]{0}', space=vmem, size = 0x1000, scoped, tag = 'input window, operand 7, single buffered']
    #allocation15 [shape = 's32[1]{0}', space=sflag, size = 0x4, scoped, tag = 'scoped memory for dense_prediction_net_with_odds.1']
    #allocation16 [shape = 'u8[2048]{0}', space=vmem, size = 0x800, scoped, tag = 'output window, operand 0, single buffered']
    %13 = vsyncpa [#allocation3], 0
    %14 = vsyncpa [#allocation6], 0
    %15 = vsyncpa [#allocation9], 0
    %16 = vsyncpa [#allocation12], 0
    %17 = vsyncpa [#allocation15], 0
    %18 = vsyncpa [#allocation4], 0
    // Predicated region
    $region2: #{dense_prediction_net_with_odds.1} parent=1 // pred_check
      _
    $region3: #{dense_prediction_net_with_odds.1} parent=1 // pred_check_branch
      %20 = sbr.rel (0) target = $region5
    $region4: #{dense_prediction_net_with_odds.1} parent=1 // pred_region
      %s22 = ssub.s32 128, 128
      %23 = vsyncadd [#allocation3], %s22
      %s25 = sshll.u32 [#allocation2], 4
      %s26 = int_to_ptr.vmem [resolvable:$true] %s25
      %28 = dma.hbm_to_vmem [thread:$0]  %s0, 128, %s26, [#allocation3]
    $region5: #{dense_prediction_net_with_odds.1} parent=1 // pred_fallthru
      _
    // Predicated region
    $region6: #{dense_prediction_net_with_odds.1} parent=1 // pred_check
      _
    $region7: #{dense_prediction_net_with_odds.1} parent=1 // pred_check_branch
      %30 = sbr.rel (0) target = $region9
    $region8: #{dense_prediction_net_with_odds.1} parent=1 // pred_region
      %s32 = ssub.s32 128, 128
      %33 = vsyncadd [#allocation6], %s32
      %s35 = sshll.u32 [#allocation5], 4
      %s36 = int_to_ptr.vmem [resolvable:$true] %s35
      %38 = dma.hbm_to_vmem [thread:$0]  %s1, 128, %s36, [#allocation6]
    $region9: #{dense_prediction_net_with_odds.1} parent=1 // pred_fallthru
      _
    // Predicated region
    $region10: #{dense_prediction_net_with_odds.1} parent=1 // pred_check
      _
    $region11: #{dense_prediction_net_with_odds.1} parent=1 // pred_check_branch
      %40 = sbr.rel (0) target = $region13
    $region12: #{dense_prediction_net_with_odds.1} parent=1 // pred_region
      %s42 = ssub.s32 64, 64
      %43 = vsyncadd [#allocation6], %s42
      %s45 = sshll.u32 [#allocation7], 4
      %s46 = int_to_ptr.vmem [resolvable:$true] %s45
      %48 = dma.hbm_to_vmem [thread:$0]  %s2, 64, %s46, [#allocation6]
    $region13: #{dense_prediction_net_with_odds.1} parent=1 // pred_fallthru
      _
    // Predicated region
    $region14: #{dense_prediction_net_with_odds.1} parent=1 // pred_check
      _
    $region15: #{dense_prediction_net_with_odds.1} parent=1 // pred_check_branch
      %50 = sbr.rel (0) target = $region17
    $region16: #{dense_prediction_net_with_odds.1} parent=1 // pred_region
      %s52 = ssub.s32 256, 256
      %53 = vsyncadd [#allocation9], %s52
      %s54 = sshll.u32 [#allocation8], 4
      %s55 = int_to_ptr.vmem [resolvable:$true] %s54
      %60 = dma.hbm_to_vmem [thread:$0]  %s3, 256, %s55, [#allocation9], 64, 64, 4
    $region17: #{dense_prediction_net_with_odds.1} parent=1 // pred_fallthru
      _
    // Predicated region
    $region18: #{dense_prediction_net_with_odds.1} parent=1 // pred_check
      _
    $region19: #{dense_prediction_net_with_odds.1} parent=1 // pred_check_branch
      %62 = sbr.rel (0) target = $region21
    $region20: #{dense_prediction_net_with_odds.1} parent=1 // pred_region
      %s64 = ssub.s32 3072, 3072
      %65 = vsyncadd [#allocation9], %s64
      %s66 = sshll.u32 [#allocation10], 4
      %s67 = int_to_ptr.vmem [resolvable:$true] %s66
      %72 = dma.hbm_to_vmem [thread:$0]  %s4, 3072, %s67, [#allocation9], 64, 64, 4
    $region21: #{dense_prediction_net_with_odds.1} parent=1 // pred_fallthru
      _
    // Predicated region
    $region22: #{dense_prediction_net_with_odds.1} parent=1 // pred_check
      _
    $region23: #{dense_prediction_net_with_odds.1} parent=1 // pred_check_branch
      %74 = sbr.rel (0) target = $region25
    $region24: #{dense_prediction_net_with_odds.1} parent=1 // pred_region
      %s76 = ssub.s32 64, 64
      %77 = vsyncadd [#allocation12], %s76
      %s79 = sshll.u32 [#allocation11], 4
      %s80 = int_to_ptr.vmem [resolvable:$true] %s79
      %82 = dma.hbm_to_vmem [thread:$0]  %s5, 64, %s80, [#allocation12]
    $region25: #{dense_prediction_net_with_odds.1} parent=1 // pred_fallthru
      _
    // Predicated region
    $region26: #{dense_prediction_net_with_odds.1} parent=1 // pred_check
      _
    $region27: #{dense_prediction_net_with_odds.1} parent=1 // pred_check_branch
      %84 = sbr.rel (0) target = $region29
    $region28: #{dense_prediction_net_with_odds.1} parent=1 // pred_region
      %s86 = ssub.s32 64, 64
      %87 = vsyncadd [#allocation12], %s86
      %s89 = sshll.u32 [#allocation13], 4
      %s90 = int_to_ptr.vmem [resolvable:$true] %s89
      %92 = dma.hbm_to_vmem [thread:$0]  %s6, 64, %s90, [#allocation12]
    $region29: #{dense_prediction_net_with_odds.1} parent=1 // pred_fallthru
      _
    // Predicated region
    $region30: #{dense_prediction_net_with_odds.1} parent=1 // pred_check
      _
    $region31: #{dense_prediction_net_with_odds.1} parent=1 // pred_check_branch
      %94 = sbr.rel (0) target = $region33
    $region32: #{dense_prediction_net_with_odds.1} parent=1 // pred_region
      %s96 = ssub.s32 128, 128
      %97 = vsyncadd [#allocation15], %s96
      %s99 = sshll.u32 [#allocation14], 4
      %s100 = int_to_ptr.vmem [resolvable:$true] %s99
      %102 = dma.hbm_to_vmem [thread:$0]  %s7, 128, %s100, [#allocation15]
    $region33: #{dense_prediction_net_with_odds.1} parent=1 // pred_fallthru
      _
    // Predicated region
    $region34: #{dense_prediction_net_with_odds.1} parent=1 // pred_check
      _
    $region35: #{dense_prediction_net_with_odds.1} parent=1 // pred_check_branch
      %104 = sbr.rel (0) target = $region37
    $region36: #{dense_prediction_net_with_odds.1} parent=1 // pred_region
      %105 = dma.done [#allocation3], 128
    $region37: #{dense_prediction_net_with_odds.1} parent=1 // pred_fallthru
      _
    // Predicated region
    $region38: #{dense_prediction_net_with_odds.1} parent=1 // pred_check
      _
    $region39: #{dense_prediction_net_with_odds.1} parent=1 // pred_check_branch
      %107 = sbr.rel (0) target = $region41
    $region40: #{dense_prediction_net_with_odds.1} parent=1 // pred_region
      %108 = dma.done [#allocation6], 128
    $region41: #{dense_prediction_net_with_odds.1} parent=1 // pred_fallthru
      _
    // Predicated region
    $region42: #{dense_prediction_net_with_odds.1} parent=1 // pred_check
      _
    $region43: #{dense_prediction_net_with_odds.1} parent=1 // pred_check_branch
      %110 = sbr.rel (0) target = $region45
    $region44: #{dense_prediction_net_with_odds.1} parent=1 // pred_region
      %111 = dma.done [#allocation6], 64
    $region45: #{dense_prediction_net_with_odds.1} parent=1 // pred_fallthru
      _
    // Predicated region
    $region46: #{dense_prediction_net_with_odds.1} parent=1 // pred_check
      _
    $region47: #{dense_prediction_net_with_odds.1} parent=1 // pred_check_branch
      %113 = sbr.rel (0) target = $region49
    $region48: #{dense_prediction_net_with_odds.1} parent=1 // pred_region
      %114 = dma.done [#allocation9], 256
    $region49: #{dense_prediction_net_with_odds.1} parent=1 // pred_fallthru
      _
    // Predicated region
    $region50: #{dense_prediction_net_with_odds.1} parent=1 // pred_check
      _
    $region51: #{dense_prediction_net_with_odds.1} parent=1 // pred_check_branch
      %116 = sbr.rel (0) target = $region53
    $region52: #{dense_prediction_net_with_odds.1} parent=1 // pred_region
      %117 = dma.done [#allocation9], 3072
    $region53: #{dense_prediction_net_with_odds.1} parent=1 // pred_fallthru
      _
    // Predicated region
    $region54: #{dense_prediction_net_with_odds.1} parent=1 // pred_check
      _
    $region55: #{dense_prediction_net_with_odds.1} parent=1 // pred_check_branch
      %119 = sbr.rel (0) target = $region57
    $region56: #{dense_prediction_net_with_odds.1} parent=1 // pred_region
      %120 = dma.done [#allocation12], 64
    $region57: #{dense_prediction_net_with_odds.1} parent=1 // pred_fallthru
      _
    // Predicated region
    $region58: #{dense_prediction_net_with_odds.1} parent=1 // pred_check
      _
    $region59: #{dense_prediction_net_with_odds.1} parent=1 // pred_check_branch
      %122 = sbr.rel (0) target = $region61
    $region60: #{dense_prediction_net_with_odds.1} parent=1 // pred_region
      %123 = dma.done [#allocation12], 64
    $region61: #{dense_prediction_net_with_odds.1} parent=1 // pred_fallthru
      _
    // Predicated region
    $region62: #{dense_prediction_net_with_odds.1} parent=1 // pred_check
      _
    $region63: #{dense_prediction_net_with_odds.1} parent=1 // pred_check_branch
      %125 = sbr.rel (0) target = $region65
    $region64: #{dense_prediction_net_with_odds.1} parent=1 // pred_region
      %126 = dma.done [#allocation15], 128
    $region65: #{dense_prediction_net_with_odds.1} parent=1 // pred_fallthru
      _
    %v128 = vld [vmem:[#allocation11] sm:$0xf]
    %v129 = vld [vmem:[#allocation14] sm:$0xff]
    %v130 = vld [vmem:[#allocation2] sm:$0xff]
    %v131 = vld [vmem:[#allocation5] sm:$0xff]
    %v132 = vld [vmem:[#allocation8] sm:$0xf]
    %v133 = vld [vmem:[#allocation8 + $0x4] sm:$0xf]
    %v134 = vld [vmem:[#allocation8 + $0x8] sm:$0xf]
    %v135 = vld [vmem:[#allocation8 + $0xc] sm:$0xf]
    %v136 = vpack.c.bf16 %v131, %v130
    %v137 = vlaneseq
    %v138 = vshrl.u32 %v137, 7
    %v139 = vsub.s32 0, %v138
    %v140 = vrot.slane %v128, %v139
    %v145 = vunpack.c.l.b16 %v132
    %v146 = vunpack.c.l.b16 %v133
    %v147 = vunpack.c.l.b16 %v134
    %v148 = vunpack.c.l.b16 %v135
    %v149 = vpack.c.b16 %v146, %v145
    %v150 = vpack.c.b16 %v148, %v147
    %vm153 = vcmask 261120
    %v155 = vsel %vm153, %v136, 0
    %157 = vmatprep.subr.bf16.mxu0 0
    %158 = vmatpush1.bf16.msra.mxu0 %v149
    %159 = vmatprep.subr.bf16.mxu0 0
    %160 = vmatpush1.bf16.msra.mxu0 %v150
    %161 = vmatprep.subr.bf16.mxu0 0
    %162 = vmatpush1.bf16.msra.mxu0 0
    %163 = vmatprep.subr.bf16.mxu0 0
    %164 = vmatpush1.bf16.msra.mxu0 0
    %165 = vmatprep.subr.bf16.mxu0 0
    %166 = vmatpush1.bf16.msra.mxu0 0
    %167 = vmatprep.subr.bf16.mxu0 0
    %168 = vmatpush1.bf16.msra.mxu0 0
    %169 = vmatprep.subr.bf16.mxu0 0
    %170 = vmatpush1.bf16.msra.mxu0 0
    %171 = vmatprep.subr.bf16.mxu0 0
    %172 = vmatpush1.bf16.msra.mxu0 0
    %173 = vmatprep.subr.bf16.mxu0 0
    %174 = vmatpush1.bf16.msra.mxu0 0
    %175 = vmatprep.subr.bf16.mxu0 0
    %176 = vmatpush1.bf16.msra.mxu0 0
    %177 = vmatprep.subr.bf16.mxu0 0
    %178 = vmatpush1.bf16.msra.mxu0 0
    %179 = vmatprep.subr.bf16.mxu0 0
    %180 = vmatpush1.bf16.msra.mxu0 0
    %181 = vmatprep.subr.bf16.mxu0 0
    %182 = vmatpush1.bf16.msra.mxu0 0
    %183 = vmatprep.subr.bf16.mxu0 0
    %184 = vmatpush1.bf16.msra.mxu0 0
    %185 = vmatprep.subr.bf16.mxu0 0
    %186 = vmatpush1.bf16.msra.mxu0 0
    %187 = vmatprep.subr.bf16.mxu0 0
    %188 = vmatpush1.bf16.msra.mxu0 0
    %189 = vmatprep.mubr.bf16.mxu0 0
    %190 = vmatmul.mubr.bf16.gmra.mrb[0].mxu0 %v155
    %v191 = vpop.f32.mrb[0].mxu0
    %v192 = vadd.f32 %v140, %v191
    %v193 = vpop.f32.mrb[0].mxu0
    %v194 = vpop.f32.mrb[0].mxu0
    %v195 = vadd.f32 %v140, %v194
    %v196 = vpop.f32.mrb[0].mxu0
    %197 = vdwg.mxu0
    %v198 = vmax.f32 %v192, 0.0
    %v199 = vmax.f32 %v195, 0.0
    %v200 = vld [vmem:[#allocation10] sm:$0xf]
    %v201 = vld [vmem:[#allocation10 + $0x4] sm:$0xf]
    %v202 = vld [vmem:[#allocation10 + $0x8] sm:$0xf]
    %v203 = vld [vmem:[#allocation10 + $0xc] sm:$0xf]
    %v204 = vld [vmem:[#allocation10 + $0x10] sm:$0xf]
    %v205 = vld [vmem:[#allocation10 + $0x14] sm:$0xf]
    %v206 = vld [vmem:[#allocation10 + $0x18] sm:$0xf]
    %v207 = vld [vmem:[#allocation10 + $0x1c] sm:$0xf]
    %v208 = vld [vmem:[#allocation10 + $0x20] sm:$0xf]
    %v209 = vld [vmem:[#allocation10 + $0x24] sm:$0xf]
    %v210 = vld [vmem:[#allocation10 + $0x28] sm:$0xf]
    %v211 = vld [vmem:[#allocation10 + $0x2c] sm:$0xf]
    %v212 = vld [vmem:[#allocation10 + $0x30] sm:$0xf]
    %v213 = vld [vmem:[#allocation10 + $0x34] sm:$0xf]
    %v214 = vld [vmem:[#allocation10 + $0x38] sm:$0xf]
    %v215 = vld [vmem:[#allocation10 + $0x3c] sm:$0xf]
    %v216 = vpack.c.bf16 %v199, %v198
    %v217 = vlaneseq
    %v218 = vshrl.u32 %v217, 7
    %v219 = vsub.s32 1, %v218
    %v220 = vrot.slane %v128, %v219
    %v237 = vunpack.c.l.b16 %v200
    %v238 = vunpack.c.l.b16 %v201
    %v239 = vunpack.c.l.b16 %v202
    %v240 = vunpack.c.l.b16 %v203
    %v241 = vunpack.c.l.b16 %v204
    %v242 = vunpack.c.l.b16 %v205
    %v243 = vunpack.c.l.b16 %v206
    %v244 = vunpack.c.l.b16 %v207
    %v245 = vunpack.c.l.b16 %v208
    %v246 = vunpack.c.l.b16 %v209
    %v247 = vunpack.c.l.b16 %v210
    %v248 = vunpack.c.l.b16 %v211
    %v249 = vunpack.c.l.b16 %v212
    %v250 = vunpack.c.l.b16 %v213
    %v251 = vunpack.c.l.b16 %v214
    %v252 = vunpack.c.l.b16 %v215
    %v253 = vpack.c.b16 %v238, %v237
    %v254 = vpack.c.b16 %v240, %v239
    %v255 = vpack.c.b16 %v242, %v241
    %v256 = vpack.c.b16 %v244, %v243
    %v257 = vpack.c.b16 %v246, %v245
    %v258 = vpack.c.b16 %v248, %v247
    %v259 = vpack.c.b16 %v250, %v249
    %v260 = vpack.c.b16 %v252, %v251
    %269 = vmatprep.subr.bf16.mxu0 0
    %270 = vmatpush1.bf16.msra.mxu0 %v253
    %271 = vmatprep.subr.bf16.mxu0 0
    %272 = vmatpush1.bf16.msra.mxu0 %v254
    %273 = vmatprep.subr.bf16.mxu0 0
    %274 = vmatpush1.bf16.msra.mxu0 %v255
    %275 = vmatprep.subr.bf16.mxu0 0
    %276 = vmatpush1.bf16.msra.mxu0 %v256
    %277 = vmatprep.subr.bf16.mxu0 0
    %278 = vmatpush1.bf16.msra.mxu0 %v257
    %279 = vmatprep.subr.bf16.mxu0 0
    %280 = vmatpush1.bf16.msra.mxu0 %v258
    %281 = vmatprep.subr.bf16.mxu0 0
    %282 = vmatpush1.bf16.msra.mxu0 %v259
    %283 = vmatprep.subr.bf16.mxu0 0
    %284 = vmatpush1.bf16.msra.mxu0 %v260
    %285 = vmatprep.subr.bf16.mxu0 0
    %286 = vmatpush1.bf16.msra.mxu0 0
    %287 = vmatprep.subr.bf16.mxu0 0
    %288 = vmatpush1.bf16.msra.mxu0 0
    %289 = vmatprep.subr.bf16.mxu0 0
    %290 = vmatpush1.bf16.msra.mxu0 0
    %291 = vmatprep.subr.bf16.mxu0 0
    %292 = vmatpush1.bf16.msra.mxu0 0
    %293 = vmatprep.subr.bf16.mxu0 0
    %294 = vmatpush1.bf16.msra.mxu0 0
    %295 = vmatprep.subr.bf16.mxu0 0
    %296 = vmatpush1.bf16.msra.mxu0 0
    %297 = vmatprep.subr.bf16.mxu0 0
    %298 = vmatpush1.bf16.msra.mxu0 0
    %299 = vmatprep.subr.bf16.mxu0 0
    %300 = vmatpush1.bf16.msra.mxu0 0
    %301 = vmatprep.mubr.bf16.mxu0 0
    %302 = vmatmul.mubr.bf16.gmra.mrb[0].mxu0 %v216
    %v303 = vpop.f32.mrb[0].mxu0
    %v304 = vadd.f32 %v220, %v303
    %v305 = vpop.f32.mrb[0].mxu0
    %v306 = vpop.f32.mrb[0].mxu0
    %v307 = vadd.f32 %v220, %v306
    %v308 = vpop.f32.mrb[0].mxu0
    %309 = vdwg.mxu0
    %v310 = vmax.f32 %v304, 0.0
    %v311 = vmax.f32 %v307, 0.0
    %v312 = vsub.f32 %v310, %v311
    %s313 = scalar_lea.vmem [#allocation10], 64
    %v314 = vld [vmem:[%s313] sm:$0xf]
    %v315 = vld [vmem:[%s313 + $0x4] sm:$0xf]
    %v316 = vld [vmem:[%s313 + $0x8] sm:$0xf]
    %v317 = vld [vmem:[%s313 + $0xc] sm:$0xf]
    %v318 = vld [vmem:[%s313 + $0x10] sm:$0xf]
    %v319 = vld [vmem:[%s313 + $0x14] sm:$0xf]
    %v320 = vld [vmem:[%s313 + $0x18] sm:$0xf]
    %v321 = vld [vmem:[%s313 + $0x1c] sm:$0xf]
    %v322 = vld [vmem:[%s313 + $0x20] sm:$0xf]
    %v323 = vld [vmem:[%s313 + $0x24] sm:$0xf]
    %v324 = vld [vmem:[%s313 + $0x28] sm:$0xf]
    %v325 = vld [vmem:[%s313 + $0x2c] sm:$0xf]
    %v326 = vld [vmem:[%s313 + $0x30] sm:$0xf]
    %v327 = vld [vmem:[%s313 + $0x34] sm:$0xf]
    %v328 = vld [vmem:[%s313 + $0x38] sm:$0xf]
    %v329 = vld [vmem:[%s313 + $0x3c] sm:$0xf]
    %v330 = vpack.c.bf16 %v312, %v312
    %v331 = vlaneseq
    %v332 = vshrl.u32 %v331, 7
    %v333 = vsub.s32 2, %v332
    %v334 = vrot.slane %v128, %v333
    %v351 = vunpack.c.l.b16 %v314
    %v352 = vunpack.c.l.b16 %v315
    %v353 = vunpack.c.l.b16 %v316
    %v354 = vunpack.c.l.b16 %v317
    %v355 = vunpack.c.l.b16 %v318
    %v356 = vunpack.c.l.b16 %v319
    %v357 = vunpack.c.l.b16 %v320
    %v358 = vunpack.c.l.b16 %v321
    %v359 = vunpack.c.l.b16 %v322
    %v360 = vunpack.c.l.b16 %v323
    %v361 = vunpack.c.l.b16 %v324
    %v362 = vunpack.c.l.b16 %v325
    %v363 = vunpack.c.l.b16 %v326
    %v364 = vunpack.c.l.b16 %v327
    %v365 = vunpack.c.l.b16 %v328
    %v366 = vunpack.c.l.b16 %v329
    %v367 = vpack.c.b16 %v352, %v351
    %v368 = vpack.c.b16 %v354, %v353
    %v369 = vpack.c.b16 %v356, %v355
    %v370 = vpack.c.b16 %v358, %v357
    %v371 = vpack.c.b16 %v360, %v359
    %v372 = vpack.c.b16 %v362, %v361
    %v373 = vpack.c.b16 %v364, %v363
    %v374 = vpack.c.b16 %v366, %v365
    %383 = vmatprep.subr.bf16.mxu0 0
    %384 = vmatpush1.bf16.msra.mxu0 %v367
    %385 = vmatprep.subr.bf16.mxu0 0
    %386 = vmatpush1.bf16.msra.mxu0 %v368
    %387 = vmatprep.subr.bf16.mxu0 0
    %388 = vmatpush1.bf16.msra.mxu0 %v369
    %389 = vmatprep.subr.bf16.mxu0 0
    %390 = vmatpush1.bf16.msra.mxu0 %v370
    %391 = vmatprep.subr.bf16.mxu0 0
    %392 = vmatpush1.bf16.msra.mxu0 %v371
    %393 = vmatprep.subr.bf16.mxu0 0
    %394 = vmatpush1.bf16.msra.mxu0 %v372
    %395 = vmatprep.subr.bf16.mxu0 0
    %396 = vmatpush1.bf16.msra.mxu0 %v373
    %397 = vmatprep.subr.bf16.mxu0 0
    %398 = vmatpush1.bf16.msra.mxu0 %v374
    %399 = vmatprep.subr.bf16.mxu0 0
    %400 = vmatpush1.bf16.msra.mxu0 0
    %401 = vmatprep.subr.bf16.mxu0 0
    %402 = vmatpush1.bf16.msra.mxu0 0
    %403 = vmatprep.subr.bf16.mxu0 0
    %404 = vmatpush1.bf16.msra.mxu0 0
    %405 = vmatprep.subr.bf16.mxu0 0
    %406 = vmatpush1.bf16.msra.mxu0 0
    %407 = vmatprep.subr.bf16.mxu0 0
    %408 = vmatpush1.bf16.msra.mxu0 0
    %409 = vmatprep.subr.bf16.mxu0 0
    %410 = vmatpush1.bf16.msra.mxu0 0
    %411 = vmatprep.subr.bf16.mxu0 0
    %412 = vmatpush1.bf16.msra.mxu0 0
    %413 = vmatprep.subr.bf16.mxu0 0
    %414 = vmatpush1.bf16.msra.mxu0 0
    %415 = vmatprep.mubr.bf16.mxu0 0
    %416 = vmatmul.mubr.bf16.gmra.mrb[0].mxu0 %v330
    %v417 = vpop.f32.mrb[0].mxu0
    %v418 = vadd.f32 %v334, %v417
    %v419 = vpop.f32.mrb[0].mxu0
    %v420 = vpop.f32.mrb[0].mxu0
    %v421 = vpop.f32.mrb[0].mxu0
    %422 = vdwg.mxu0
    %v423 = vmax.f32 %v418, 0.0
    %s424 = scalar_lea.vmem [#allocation10], 128
    %v425 = vld [vmem:[%s424] sm:$0xf]
    %v426 = vld [vmem:[%s424 + $0x4] sm:$0xf]
    %v427 = vld [vmem:[%s424 + $0x8] sm:$0xf]
    %v428 = vld [vmem:[%s424 + $0xc] sm:$0xf]
    %v429 = vld [vmem:[%s424 + $0x10] sm:$0xf]
    %v430 = vld [vmem:[%s424 + $0x14] sm:$0xf]
    %v431 = vld [vmem:[%s424 + $0x18] sm:$0xf]
    %v432 = vld [vmem:[%s424 + $0x1c] sm:$0xf]
    %v433 = vld [vmem:[%s424 + $0x20] sm:$0xf]
    %v434 = vld [vmem:[%s424 + $0x24] sm:$0xf]
    %v435 = vld [vmem:[%s424 + $0x28] sm:$0xf]
    %v436 = vld [vmem:[%s424 + $0x2c] sm:$0xf]
    %v437 = vld [vmem:[%s424 + $0x30] sm:$0xf]
    %v438 = vld [vmem:[%s424 + $0x34] sm:$0xf]
    %v439 = vld [vmem:[%s424 + $0x38] sm:$0xf]
    %v440 = vld [vmem:[%s424 + $0x3c] sm:$0xf]
    %v441 = vpack.c.bf16 %v423, %v423
    %v442 = vlaneseq
    %v443 = vshrl.u32 %v442, 7
    %v444 = vsub.s32 3, %v443
    %v445 = vrot.slane %v128, %v444
    %v462 = vunpack.c.l.b16 %v425
    %v463 = vunpack.c.l.b16 %v426
    %v464 = vunpack.c.l.b16 %v427
    %v465 = vunpack.c.l.b16 %v428
    %v466 = vunpack.c.l.b16 %v429
    %v467 = vunpack.c.l.b16 %v430
    %v468 = vunpack.c.l.b16 %v431
    %v469 = vunpack.c.l.b16 %v432
    %v470 = vunpack.c.l.b16 %v433
    %v471 = vunpack.c.l.b16 %v434
    %v472 = vunpack.c.l.b16 %v435
    %v473 = vunpack.c.l.b16 %v436
    %v474 = vunpack.c.l.b16 %v437
    %v475 = vunpack.c.l.b16 %v438
    %v476 = vunpack.c.l.b16 %v439
    %v477 = vunpack.c.l.b16 %v440
    %v478 = vpack.c.b16 %v463, %v462
    %v479 = vpack.c.b16 %v465, %v464
    %v480 = vpack.c.b16 %v467, %v466
    %v481 = vpack.c.b16 %v469, %v468
    %v482 = vpack.c.b16 %v471, %v470
    %v483 = vpack.c.b16 %v473, %v472
    %v484 = vpack.c.b16 %v475, %v474
    %v485 = vpack.c.b16 %v477, %v476
    %494 = vmatprep.subr.bf16.mxu0 0
    %495 = vmatpush1.bf16.msra.mxu0 %v478
    %496 = vmatprep.subr.bf16.mxu0 0
    %497 = vmatpush1.bf16.msra.mxu0 %v479
    %498 = vmatprep.subr.bf16.mxu0 0
    %499 = vmatpush1.bf16.msra.mxu0 %v480
    %500 = vmatprep.subr.bf16.mxu0 0
    %501 = vmatpush1.bf16.msra.mxu0 %v481
    %502 = vmatprep.subr.bf16.mxu0 0
    %503 = vmatpush1.bf16.msra.mxu0 %v482
    %504 = vmatprep.subr.bf16.mxu0 0
    %505 = vmatpush1.bf16.msra.mxu0 %v483
    %506 = vmatprep.subr.bf16.mxu0 0
    %507 = vmatpush1.bf16.msra.mxu0 %v484
    %508 = vmatprep.subr.bf16.mxu0 0
    %509 = vmatpush1.bf16.msra.mxu0 %v485
    %510 = vmatprep.subr.bf16.mxu0 0
    %511 = vmatpush1.bf16.msra.mxu0 0
    %512 = vmatprep.subr.bf16.mxu0 0
    %513 = vmatpush1.bf16.msra.mxu0 0
    %514 = vmatprep.subr.bf16.mxu0 0
    %515 = vmatpush1.bf16.msra.mxu0 0
    %516 = vmatprep.subr.bf16.mxu0 0
    %517 = vmatpush1.bf16.msra.mxu0 0
    %518 = vmatprep.subr.bf16.mxu0 0
    %519 = vmatpush1.bf16.msra.mxu0 0
    %520 = vmatprep.subr.bf16.mxu0 0
    %521 = vmatpush1.bf16.msra.mxu0 0
    %522 = vmatprep.subr.bf16.mxu0 0
    %523 = vmatpush1.bf16.msra.mxu0 0
    %524 = vmatprep.subr.bf16.mxu0 0
    %525 = vmatpush1.bf16.msra.mxu0 0
    %526 = vmatprep.mubr.bf16.mxu0 0
    %527 = vmatmul.mubr.bf16.gmra.mrb[0].mxu0 %v441
    %v528 = vpop.f32.mrb[0].mxu0
    %v529 = vadd.f32 %v445, %v528
    %v530 = vpop.f32.mrb[0].mxu0
    %v531 = vpop.f32.mrb[0].mxu0
    %v532 = vpop.f32.mrb[0].mxu0
    %533 = vdwg.mxu0
    %v534 = vmax.f32 %v529, 0.0
    %v535 = vld [vmem:[#allocation13] sm:$0xf]
    %v536 = vpack.c.bf16 %v534, %v534
    %538 = vset.pattern.permute.xlu0 0
    %539 = vperm.xlu0 %538, %v129
    %v540 = vpop.permute.xlu0 %539
    %542 = vmatprep.subr.bf16.mxu0 0
    %543 = vmatpush1.bf16.xpose.msra.mxu0 %v536
    %544 = vmatprep.subr.bf16.mxu0 0
    %545 = vmatpush1.bf16.xpose.msra.mxu0 0
    %546 = vmatprep.subr.bf16.mxu0 0
    %547 = vmatpush1.bf16.xpose.msra.mxu0 0
    %548 = vmatprep.subr.bf16.mxu0 0
    %549 = vmatpush1.bf16.xpose.msra.mxu0 0
    %550 = vmatprep.subr.bf16.mxu0 0
    %551 = vmatpush1.bf16.xpose.msra.mxu0 0
    %552 = vmatprep.subr.bf16.mxu0 0
    %553 = vmatpush1.bf16.xpose.msra.mxu0 0
    %554 = vmatprep.subr.bf16.mxu0 0
    %555 = vmatpush1.bf16.xpose.msra.mxu0 0
    %556 = vmatprep.subr.bf16.mxu0 0
    %557 = vmatpush1.bf16.xpose.msra.mxu0 0
    %558 = vmatprep.subr.bf16.mxu0 0
    %559 = vmatpush1.bf16.xpose.msra.mxu0 0
    %560 = vmatprep.subr.bf16.mxu0 0
    %561 = vmatpush1.bf16.xpose.msra.mxu0 0
    %562 = vmatprep.subr.bf16.mxu0 0
    %563 = vmatpush1.bf16.xpose.msra.mxu0 0
    %564 = vmatprep.subr.bf16.mxu0 0
    %565 = vmatpush1.bf16.xpose.msra.mxu0 0
    %566 = vmatprep.subr.bf16.mxu0 0
    %567 = vmatpush1.bf16.xpose.msra.mxu0 0
    %568 = vmatprep.subr.bf16.mxu0 0
    %569 = vmatpush1.bf16.xpose.msra.mxu0 0
    %570 = vmatprep.subr.bf16.mxu0 0
    %571 = vmatpush1.bf16.xpose.msra.mxu0 0
    %572 = vmatprep.subr.bf16.mxu0 0
    %573 = vmatpush1.bf16.xpose.msra.mxu0 0
    %574 = vmatprep.mubr.bf16.mxu0 0
    %575 = vmatmul.mubr.bf16.gmra.mrb[0].mxu0 %v535
    %v576 = vpop.f32.mrb[0].mxu0
    %v577 = vadd.f32 %v540, %v576
    %v578 = vpop.f32.mrb[0].mxu0
    %v579 = vpop.f32.mrb[0].mxu0
    %v580 = vpop.f32.mrb[0].mxu0
    %581 = vdwg.mxu0
    %vm582 = vcmask 64512
    %v583 = vsel %vm582, %v577, -inf
    %v584 = vrot.slane %v583, 4
    %v585 = vmax.f32 %v583, %v584
    %v586 = vrot.slane %v585, 2
    %v587 = vmax.f32 %v585, %v586
    %v588 = vrot.slane %v587, 1
    %v589 = vmax.f32 %v587, %v588
    %v590 = vsub.f32 %v577, %v589
    %v591 = vmul.f32 %v590, 1.442695
    %v592 = vpow.pop %v591
    %v593 = vsel %vm582, %v592, 0.0
    %v594 = vrot.slane %v593, 4
    %v595 = vadd.f32 %v593, %v594
    %v596 = vrot.slane %v595, 2
    %v597 = vadd.f32 %v595, %v596
    %v598 = vrot.slane %v597, 1
    %v599 = vadd.f32 %v597, %v598
    %v600 = vrcp.pop %v599
    %v601 = vmul.f32 %v599, %v600
    %v602 = vsub.f32 2.0, %v601
    %v603 = vmul.f32 %v600, %v602
    %v604 = vmul.f32 %v592, %v603
    %v605 = vld [vmem:[#allocation7] sm:$0xf]
    %vm606 = vcmp.ne.f32.partialorder %v605, %v605
    %v607 = vsel %vm606, 0.0, %v605
    %608 = vset.pattern.permute.xlu0 1
    %609 = vperm.xlu0 %608, %v129
    %v610 = vpop.permute.xlu0 %609
    %v612 = vlaneseq
    %v613 = vshrl.u32 %v612, 7
    %v614 = vsub.s32 0, %v613
    %v615 = vrot.slane %v604, %v614
    %v616 = vmul.f32 %v610, %v615
    %617 = vset.pattern.permute.xlu0 8
    %618 = vperm.xlu0 %617, %v129
    %v619 = vpop.permute.xlu0 %618
    %v621 = vadd.f32 %v619, %v616
    %622 = vset.pattern.permute.xlu0 2
    %623 = vperm.xlu0 %622, %v129
    %v624 = vpop.permute.xlu0 %623
    %v626 = vlaneseq
    %v627 = vshrl.u32 %v626, 7
    %v628 = vsub.s32 1, %v627
    %v629 = vrot.slane %v604, %v628
    %v630 = vmul.f32 %v624, %v629
    %v631 = vadd.f32 %v621, %v630
    %632 = vset.pattern.permute.xlu0 3
    %633 = vperm.xlu0 %632, %v129
    %v634 = vpop.permute.xlu0 %633
    %v636 = vlaneseq
    %v637 = vshrl.u32 %v636, 7
    %v638 = vsub.s32 2, %v637
    %v639 = vrot.slane %v604, %v638
    %v640 = vmul.f32 %v634, %v639
    %v641 = vadd.f32 %v631, %v640
    %642 = vset.pattern.permute.xlu0 4
    %643 = vperm.xlu0 %642, %v129
    %v644 = vpop.permute.xlu0 %643
    %v646 = vlaneseq
    %v647 = vshrl.u32 %v646, 7
    %v648 = vsub.s32 0, %v647
    %v649 = vrot.slane %v607, %v648
    %v650 = vmul.f32 %v644, %v649
    %v651 = vadd.f32 %v641, %v650
    %652 = vset.pattern.permute.xlu0 5
    %653 = vperm.xlu0 %652, %v129
    %v654 = vpop.permute.xlu0 %653
    %v656 = vlaneseq
    %v657 = vshrl.u32 %v656, 7
    %v658 = vsub.s32 1, %v657
    %v659 = vrot.slane %v607, %v658
    %v660 = vmul.f32 %v654, %v659
    %v661 = vadd.f32 %v651, %v660
    %662 = vset.pattern.permute.xlu0 6
    %663 = vperm.xlu0 %662, %v129
    %v664 = vpop.permute.xlu0 %663
    %v666 = vlaneseq
    %v667 = vshrl.u32 %v666, 7
    %v668 = vsub.s32 2, %v667
    %v669 = vrot.slane %v607, %v668
    %v670 = vmul.f32 %v664, %v669
    %v671 = vadd.f32 %v661, %v670
    %672 = vset.pattern.permute.xlu0 7
    %673 = vperm.xlu0 %672, %v129
    %v674 = vpop.permute.xlu0 %673
    %v676 = vlaneseq
    %v677 = vshrl.u32 %v676, 7
    %v678 = vsub.s32 3, %v677
    %v679 = vrot.slane %v607, %v678
    %v680 = vmul.f32 %v674, %v679
    %v681 = vadd.f32 %v671, %v680
    %v682 = vmax.f32 %v681, 0.0
    %683 = vset.pattern.permute.xlu0 9
    %684 = vperm.xlu0 %683, %v129
    %v685 = vpop.permute.xlu0 %684
    %v687 = vlaneseq
    %v688 = vshrl.u32 %v687, 7
    %v689 = vsub.s32 0, %v688
    %v690 = vrot.slane %v682, %v689
    %v691 = vmul.f32 %v685, %v690
    %692 = vset.pattern.permute.xlu0 12
    %693 = vperm.xlu0 %692, %v129
    %v694 = vpop.permute.xlu0 %693
    %v696 = vadd.f32 %v694, %v691
    %697 = vset.pattern.permute.xlu0 10
    %698 = vperm.xlu0 %697, %v129
    %v699 = vpop.permute.xlu0 %698
    %v701 = vlaneseq
    %v702 = vshrl.u32 %v701, 7
    %v703 = vsub.s32 1, %v702
    %v704 = vrot.slane %v682, %v703
    %v705 = vmul.f32 %v699, %v704
    %v706 = vadd.f32 %v696, %v705
    %707 = vset.pattern.permute.xlu0 11
    %708 = vperm.xlu0 %707, %v129
    %v709 = vpop.permute.xlu0 %708
    %v711 = vlaneseq
    %v712 = vshrl.u32 %v711, 7
    %v713 = vsub.s32 2, %v712
    %v714 = vrot.slane %v682, %v713
    %v715 = vmul.f32 %v709, %v714
    %v716 = vadd.f32 %v706, %v715
    %vm717 = vcmask 59392
    %v718 = vsel %vm717, %v716, -inf
    %v719 = vrot.slane %v718, 4
    %v720 = vmax.f32 %v718, %v719
    %v721 = vrot.slane %v720, 2
    %v722 = vmax.f32 %v720, %v721
    %v723 = vrot.slane %v722, 1
    %v724 = vmax.f32 %v722, %v723
    %v725 = vsub.f32 %v716, %v724
    %v726 = vmul.f32 %v725, 1.442695
    %v727 = vpow.pop %v726
    %v728 = vsel %vm717, %v727, 0.0
    %v729 = vrot.slane %v728, 4
    %v730 = vadd.f32 %v728, %v729
    %v731 = vrot.slane %v730, 2
    %v732 = vadd.f32 %v730, %v731
    %v733 = vrot.slane %v732, 1
    %v734 = vadd.f32 %v732, %v733
    %v735 = vrcp.pop %v734
    %v736 = vmul.f32 %v734, %v735
    %v737 = vsub.f32 2.0, %v736
    %v738 = vmul.f32 %v735, %v737
    %v739 = vmul.f32 %v727, %v738
    %740 = vst.msk [vmem:[#allocation16] sm:$0x7] %vm717, %v739
    // Predicated region
    $region66: #{dense_prediction_net_with_odds.1} parent=1 // pred_check
      _
    $region67: #{dense_prediction_net_with_odds.1} parent=1 // pred_check_branch
      %742 = sbr.rel (0) target = $region69
    $region68: #{dense_prediction_net_with_odds.1} parent=1 // pred_region
      %s744 = ssub.s32 64, 64
      %745 = vsyncadd [#allocation4], %s744
      %s747 = sshll.u32 [#allocation16], 4
      %s748 = int_to_ptr.vmem [resolvable:$true] %s747
      %750 = dma.vmem_to_hbm [thread:$0]  %s748, 64, %s8, [#allocation4]
    $region69: #{dense_prediction_net_with_odds.1} parent=1 // pred_fallthru
      _
    // Predicated region
    $region70: #{dense_prediction_net_with_odds.1} parent=1 // pred_check
      _
    $region71: #{dense_prediction_net_with_odds.1} parent=1 // pred_check_branch
      %752 = sbr.rel (0) target = $region73
    $region72: #{dense_prediction_net_with_odds.1} parent=1 // pred_region
      %753 = dma.done [#allocation4], 64
    $region73: #{dense_prediction_net_with_odds.1} parent=1 // pred_fallthru
      _
    %754 = vsyncpa [#allocation3], 1
    %755 = vsyncpa [#allocation6], 1
    %756 = vsyncpa [#allocation9], 1
    %757 = vsyncpa [#allocation12], 1
    %758 = vsyncpa [#allocation15], 1
    %759 = vsyncpa [#allocation4], 1

</llo_original>
